<compile_context>
chip_gen: v6e
topology: v6e:2x2x1
jax: 0.10.0
libtpu: 0.0.40
codegen_flags: <defaults>
</compile_context>

<pallas_src>
import functools

import numpy as np
import jax
import jax.numpy as jnp
from jax.experimental import pallas as pl
from jax.experimental.pallas import tpu as pltpu


# ----------------------------- kernel ---------------------------------------

def _local_aug_kernel(fine_ref, coarse_ref, motif_ref,
                      wq_ref, wk_ref, wv_ref, wo_ref, bo_ref, hmask_ref,
                      out_ref, *, inv_dk):
    xf = fine_ref[...]          # [bm, H]  streamed activations
    xc = coarse_ref[...]        # [bm, H]
    xm = motif_ref[...]         # [bm, H]

    # H x H projections (weights pre-transposed once in prepare_params) -> MXU,
    # f32 accumulation.
    q  = jnp.dot(xm, wq_ref[...], preferred_element_type=jnp.float32)
    kf = jnp.dot(xf, wk_ref[...], preferred_element_type=jnp.float32)
    kc = jnp.dot(xc, wk_ref[...], preferred_element_type=jnp.float32)
    vf = jnp.dot(xf, wv_ref[...], preferred_element_type=jnp.float32)
    vc = jnp.dot(xc, wv_ref[...], preferred_element_type=jnp.float32)

    # Vectorized per-head 2-key attention (no head loop, no concatenate):
    #   softmax([s_f, s_c]) over the 2 keys == a_f = sigmoid(s_f - s_c), a_c = 1 - a_f.
    #   s_f - s_c per head = segment-sum_head(q * (kf - kc)) / d_k.  The segment sum
    #   (and its broadcast back to every lane of the head) is one [H, H] block-diagonal
    #   matmul on the MXU instead of 2*heads cross-lane XLU reductions.
    diff = q * (kf - kc)                                                     # VPU
    s = jnp.dot(diff, hmask_ref[...], preferred_element_type=jnp.float32) * inv_dk
    a_f = pl.reciprocal(1.0 + jnp.exp(-s), approx=True)   # sigmoid, EUP; stable
    attn = vc + a_f * (vf - vc)            # == a_f*vf + (1-a_f)*vc           # VPU

    # W_o (with bias) -> MXU; single lane-dense store of the full (bm, H) block.
    out = jnp.dot(attn, wo_ref[...], preferred_element_type=jnp.float32) + bo_ref[...]
    out_ref[...] = out.astype(out_ref.dtype)


# ----------------------------- parameter prep --------------------------------

def prepare_params(wq, wk, wv, wo, bo, *, param_dtype=jnp.float32):
    """One-time weight prep, hoisted out of the per-call hot path.
    torch nn.Linear stores [out, in]; the kernel consumes [in, out]."""
    t = lambda w: jnp.asarray(w, param_dtype).T
    return (t(wq), t(wk), t(wv), t(wo),
            jnp.asarray(bo, jnp.float32).reshape(1, -1))


def _head_mask(H, heads, dtype=jnp.float32):
    """[H, H] block-diagonal 0/1 matrix: 1 iff lanes i, j belong to the same head."""
    d_k = H // heads
    hid = np.arange(H) // d_k
    return jnp.asarray(hid[:, None] == hid[None, :], dtype=dtype)


# ----------------------------- sizing ----------------------------------------

def _pick_block_b(B, H, act_bytes, budget_bytes=24 << 20):
    """Rows per grid step, from an explicit per-row VMEM working-set:
    double-buffered streamed inputs + double-buffered output + ~8 live f32 temps."""
    per_row = 2 * 3 * H * act_bytes + 2 * H * 4 + 8 * H * 4
    bm = max(8, budget_bytes // per_row)
    if B >= 16:
        # Guarantee >= 2 grid steps so the "parallel" batch axis can be split
        # across v7x's two TensorCores (no effect on v5e/v6e, 1 TC).
        bm = min(bm, ((pl.cdiv(B, 2) + 7) // 8) * 8)
    if bm >= B:
        return B                           # single full-extent block
    return max(8, (bm // 8) * 8)           # multiple of 8 for the (8,128) rule


def _vmem_limit_bytes(block_b, H, act_bytes):
    """Derived VMEM budget (instead of a fixed constant)."""
    act = block_b * H
    streamed = 2 * 3 * act * act_bytes              # double-buffered fine/coarse/motif
    out_buf  = 2 * act * 4                          # double-buffered output block
    live     = 8 * act * 4                          # q,kf,kc,vf,vc,diff,a_f,attn (f32)
    consts   = 2 * (4 * H * H * act_bytes + H * H * 4 + 2 * H * 4)  # weights+mask+bias
    total = streamed + out_buf + live + consts
    # 2x headroom for compiler scratch; clamp to a range valid on v5e/v6e/v7x (64 MiB/TC).
    return int(min(max(2 * total, 16 << 20), 48 << 20))


# ----------------------------- wrapper ----------------------------------------

def local_augmentation(fine, coarse, motif, params, *, heads,
                       block_b=None, stream_dtype=None):
    """fine/coarse/motif: [B, H]; params = prepare_params(Wq, Wk, Wv, Wo, b_o).
    Returns [B, H] (matches the torch module's motif_messages.squeeze(1))."""
    wq_t, wk_t, wv_t, wo_t, bo2d = params
    B, H = fine.shape
    assert coarse.shape == (B, H) and motif.shape == (B, H)
    assert H % heads == 0
    d_k = H // heads

    if stream_dtype is not None:
        # bf16 streaming halves HBM traffic (biggest relative win on v5e / v6e);
        # all attention math stays in f32 via preferred_element_type.
        fine = fine.astype(stream_dtype)
        coarse = coarse.astype(stream_dtype)
        motif = motif.astype(stream_dtype)
        wq_t, wk_t, wv_t, wo_t = (w.astype(stream_dtype)
                                  for w in (wq_t, wk_t, wv_t, wo_t))
    act_bytes = jnp.dtype(fine.dtype).itemsize

    if block_b is None:
        block_b = _pick_block_b(B, H, act_bytes)
    grid = (pl.cdiv(B, block_b),)

    hmask = _head_mask(H, heads)

    row_in_spec = pl.BlockSpec((block_b, H), lambda i: (i, 0))
    out_spec    = pl.BlockSpec((block_b, H), lambda i: (i, 0))
    w_spec      = pl.BlockSpec((H, H), lambda i: (0, 0))
    b_spec      = pl.BlockSpec((1, H), lambda i: (0, 0))
    # NOTE: at production-scale H, mark the grid-invariant w_spec/b_spec with
    # pipeline_mode=pl.Buffered(1) to avoid double-buffering ~4*H*H weight bytes,
    # and pad/pack H to a multiple of 128 for unmasked lane-dense stores.

    kernel = functools.partial(_local_aug_kernel, inv_dk=float(1.0 / d_k))

    out = pl.pallas_call(
        kernel,
        out_shape=jax.ShapeDtypeStruct((B, H), jnp.float32),
        grid_spec=pltpu.PrefetchScalarGridSpec(
            num_scalar_prefetch=0,
            grid=grid,
            in_specs=[row_in_spec, row_in_spec, row_in_spec,   # fine, coarse, motif
                      w_spec, w_spec, w_spec, w_spec,          # Wq.T, Wk.T, Wv.T, Wo.T
                      b_spec,                                  # bias [1, H]
                      w_spec],                                 # head mask [H, H]
            out_specs=out_spec,
        ),
        compiler_params=pltpu.CompilerParams(
            dimension_semantics=("parallel",),                 # batch rows independent
            vmem_limit_bytes=_vmem_limit_bytes(block_b, H, act_bytes),
        ),
    )(fine, coarse, motif, wq_t, wk_t, wv_t, wo_t, bo2d, hmask)
    return out


# ----------------------------- reference (plain JAX) -------------------------

def _ref_local_augmentation(fine, coarse, motif, wq, wk, wv, wo, bo, *, heads):
    B, H = fine.shape
    d_k = H // heads
    q = motif @ wq.T                                         # [B, H]
    kv_in = jnp.stack([fine, coarse], axis=1)                # [B, 2, H]
    k = kv_in @ wk.T
    v = kv_in @ wv.T
    qh = q.reshape(B, 1, heads, d_k).transpose(0, 2, 1, 3)   # [B, heads, 1, d_k]
    kh = k.reshape(B, 2, heads, d_k).transpose(0, 2, 1, 3)   # [B, heads, 2, d_k]
    vh = v.reshape(B, 2, heads, d_k).transpose(0, 2, 1, 3)
    scores = jnp.einsum("bhqd,bhkd->bhqk", qh, kh) / d_k     # [B, heads, 1, 2]
    att = jax.nn.softmax(scores, axis=-1)
    out = jnp.einsum("bhqk,bhkd->bhqd", att, vh)             # [B, heads, 1, d_k]
    out = out.transpose(0, 2, 1, 3).reshape(B, H)
    return out @ wo.T + bo


# ----------------------------- main -------------------------------------------

if __name__ == "__main__":
    B, H, heads = 2, 32, 4            # batch=2, hid_dim=32, heads=4 -> d_k=8
    key = jax.random.PRNGKey(0)
    ks = jax.random.split(key, 8)

    fine   = jax.random.normal(ks[0], (B, H), dtype=jnp.float32)
    coarse = jax.random.normal(ks[1], (B, H), dtype=jnp.float32)
    motif  = jax.random.normal(ks[2], (B, H), dtype=jnp.float32)

    scale = 1.0 / np.sqrt(H)
    wq = jax.random.normal(ks[3], (H, H), dtype=jnp.float32) * scale
    wk = jax.random.normal(ks[4], (H, H), dtype=jnp.float32) * scale
    wv = jax.random.normal(ks[5], (H, H), dtype=jnp.float32) * scale
    wo = jax.random.normal(ks[6], (H, H), dtype=jnp.float32) * scale
    bo = jax.random.normal(ks[7], (H,), dtype=jnp.float32) * 0.01

    params = prepare_params(wq, wk, wv, wo, bo)              # one-time, out of hot path

    out = local_augmentation(fine, coarse, motif, params, heads=heads)
    out = jax.block_until_ready(out)

    ref = _ref_local_augmentation(fine, coarse, motif, wq, wk, wv, wo, bo, heads=heads)
    assert out.shape == (B, H)
    # Tolerance absorbs default-precision (bf16-input) MXU rounding in both paths.
    assert np.allclose(np.asarray(out), np.asarray(ref), rtol=1e-2, atol=1e-2), (
        float(np.max(np.abs(np.asarray(out) - np.asarray(ref)))))

    print("KERNEL_OK")
</pallas_src>

<mosaic_0001>
module attributes {stable_mosaic.version = 11 : i64} {
  func.func @_local_aug_kernel(%arg0: i32, %arg1: memref<2x32xf32, #tpu.memory_space<vmem>>, %arg2: memref<2x32xf32, #tpu.memory_space<vmem>>, %arg3: memref<2x32xf32, #tpu.memory_space<vmem>>, %arg4: memref<32x32xf32, #tpu.memory_space<vmem>>, %arg5: memref<32x32xf32, #tpu.memory_space<vmem>>, %arg6: memref<32x32xf32, #tpu.memory_space<vmem>>, %arg7: memref<32x32xf32, #tpu.memory_space<vmem>>, %arg8: memref<1x32xf32, #tpu.memory_space<vmem>>, %arg9: memref<32x32xf32, #tpu.memory_space<vmem>>, %arg10: memref<2x32xf32, #tpu.memory_space<vmem>>) attributes {dimension_semantics = [#tpu.dimension_semantics<parallel>], iteration_bounds = array<i64: 1>, scalar_prefetch = 0 : i64, scratch_operands = 0 : i64, tpu.core_type = #tpu.core_type<tc>, window_params = [{transform_indices = @transform_0, window_bounds = array<i64: 2, 32>}, {transform_indices = @transform_1, window_bounds = array<i64: 2, 32>}, {transform_indices = @transform_2, window_bounds = array<i64: 2, 32>}, {pipeline_mode = #tpu.pipeline_mode<synchronous>, transform_indices = @transform_3, window_bounds = array<i64: 32, 32>}, {pipeline_mode = #tpu.pipeline_mode<synchronous>, transform_indices = @transform_4, window_bounds = array<i64: 32, 32>}, {pipeline_mode = #tpu.pipeline_mode<synchronous>, transform_indices = @transform_5, window_bounds = array<i64: 32, 32>}, {pipeline_mode = #tpu.pipeline_mode<synchronous>, transform_indices = @transform_6, window_bounds = array<i64: 32, 32>}, {pipeline_mode = #tpu.pipeline_mode<synchronous>, transform_indices = @transform_7, window_bounds = array<i64: 1, 32>}, {pipeline_mode = #tpu.pipeline_mode<synchronous>, transform_indices = @transform_8, window_bounds = array<i64: 32, 32>}, {transform_indices = @transform_9, window_bounds = array<i64: 2, 32>}]} {
    %c0 = arith.constant 0 : index
    %c0_0 = arith.constant 0 : index
    %0 = vector.load %arg1[%c0, %c0_0] : memref<2x32xf32, #tpu.memory_space<vmem>>, vector<2x32xf32>
    %c0_1 = arith.constant 0 : index
    %c0_2 = arith.constant 0 : index
    %1 = vector.load %arg2[%c0_1, %c0_2] : memref<2x32xf32, #tpu.memory_space<vmem>>, vector<2x32xf32>
    %c0_3 = arith.constant 0 : index
    %c0_4 = arith.constant 0 : index
    %2 = vector.load %arg3[%c0_3, %c0_4] : memref<2x32xf32, #tpu.memory_space<vmem>>, vector<2x32xf32>
    %c0_5 = arith.constant 0 : index
    %c0_6 = arith.constant 0 : index
    %3 = vector.load %arg4[%c0_5, %c0_6] : memref<32x32xf32, #tpu.memory_space<vmem>>, vector<32x32xf32>
    %cst = arith.constant dense<0.000000e+00> : vector<2x32xf32>
    %4 = tpu.matmul %2, %3, %cst {dimension_numbers = #tpu.dot_dimension_numbers<[1], [0], [0], [1], [0, 0, 1, 1], [], []>} : vector<2x32xf32>, vector<32x32xf32>, vector<2x32xf32> -> vector<2x32xf32>
    %c0_7 = arith.constant 0 : index
    %c0_8 = arith.constant 0 : index
    %5 = vector.load %arg5[%c0_7, %c0_8] : memref<32x32xf32, #tpu.memory_space<vmem>>, vector<32x32xf32>
    %cst_9 = arith.constant dense<0.000000e+00> : vector<2x32xf32>
    %6 = tpu.matmul %0, %5, %cst_9 {dimension_numbers = #tpu.dot_dimension_numbers<[1], [0], [0], [1], [0, 0, 1, 1], [], []>} : vector<2x32xf32>, vector<32x32xf32>, vector<2x32xf32> -> vector<2x32xf32>
    %c0_10 = arith.constant 0 : index
    %c0_11 = arith.constant 0 : index
    %7 = vector.load %arg5[%c0_10, %c0_11] : memref<32x32xf32, #tpu.memory_space<vmem>>, vector<32x32xf32>
    %cst_12 = arith.constant dense<0.000000e+00> : vector<2x32xf32>
    %8 = tpu.matmul %1, %7, %cst_12 {dimension_numbers = #tpu.dot_dimension_numbers<[1], [0], [0], [1], [0, 0, 1, 1], [], []>} : vector<2x32xf32>, vector<32x32xf32>, vector<2x32xf32> -> vector<2x32xf32>
    %c0_13 = arith.constant 0 : index
    %c0_14 = arith.constant 0 : index
    %9 = vector.load %arg6[%c0_13, %c0_14] : memref<32x32xf32, #tpu.memory_space<vmem>>, vector<32x32xf32>
    %cst_15 = arith.constant dense<0.000000e+00> : vector<2x32xf32>
    %10 = tpu.matmul %0, %9, %cst_15 {dimension_numbers = #tpu.dot_dimension_numbers<[1], [0], [0], [1], [0, 0, 1, 1], [], []>} : vector<2x32xf32>, vector<32x32xf32>, vector<2x32xf32> -> vector<2x32xf32>
    %c0_16 = arith.constant 0 : index
    %c0_17 = arith.constant 0 : index
    %11 = vector.load %arg6[%c0_16, %c0_17] : memref<32x32xf32, #tpu.memory_space<vmem>>, vector<32x32xf32>
    %cst_18 = arith.constant dense<0.000000e+00> : vector<2x32xf32>
    %12 = tpu.matmul %1, %11, %cst_18 {dimension_numbers = #tpu.dot_dimension_numbers<[1], [0], [0], [1], [0, 0, 1, 1], [], []>} : vector<2x32xf32>, vector<32x32xf32>, vector<2x32xf32> -> vector<2x32xf32>
    %13 = arith.subf %6, %8 : vector<2x32xf32>
    %14 = arith.mulf %4, %13 : vector<2x32xf32>
    %c0_19 = arith.constant 0 : index
    %c0_20 = arith.constant 0 : index
    %15 = vector.load %arg9[%c0_19, %c0_20] : memref<32x32xf32, #tpu.memory_space<vmem>>, vector<32x32xf32>
    %cst_21 = arith.constant dense<0.000000e+00> : vector<2x32xf32>
    %16 = tpu.matmul %14, %15, %cst_21 {dimension_numbers = #tpu.dot_dimension_numbers<[1], [0], [0], [1], [0, 0, 1, 1], [], []>} : vector<2x32xf32>, vector<32x32xf32>, vector<2x32xf32> -> vector<2x32xf32>
    %cst_22 = arith.constant 1.250000e-01 : f32
    %17 = vector.broadcast %cst_22 : f32 to vector<2x32xf32>
    %18 = arith.mulf %16, %17 : vector<2x32xf32>
    %cst_23 = arith.constant 0.000000e+00 : f32
    %19 = vector.broadcast %cst_23 : f32 to vector<2x32xf32>
    %20 = arith.subf %19, %18 : vector<2x32xf32>
    %21 = math.exp %20 : vector<2x32xf32>
    %cst_24 = arith.constant 1.000000e+00 : f32
    %22 = vector.broadcast %cst_24 : f32 to vector<2x32xf32>
    %23 = arith.addf %22, %21 : vector<2x32xf32>
    %24 = tpu.reciprocal %23 {approx = true} : vector<2x32xf32> -> vector<2x32xf32>
    %25 = arith.subf %10, %12 : vector<2x32xf32>
    %26 = arith.mulf %24, %25 : vector<2x32xf32>
    %27 = arith.addf %12, %26 : vector<2x32xf32>
    %c0_25 = arith.constant 0 : index
    %c0_26 = arith.constant 0 : index
    %28 = vector.load %arg7[%c0_25, %c0_26] : memref<32x32xf32, #tpu.memory_space<vmem>>, vector<32x32xf32>
    %cst_27 = arith.constant dense<0.000000e+00> : vector<2x32xf32>
    %29 = tpu.matmul %27, %28, %cst_27 {dimension_numbers = #tpu.dot_dimension_numbers<[1], [0], [0], [1], [0, 0, 1, 1], [], []>} : vector<2x32xf32>, vector<32x32xf32>, vector<2x32xf32> -> vector<2x32xf32>
    %c0_28 = arith.constant 0 : index
    %c0_29 = arith.constant 0 : index
    %30 = vector.load %arg8[%c0_28, %c0_29] : memref<1x32xf32, #tpu.memory_space<vmem>>, vector<1x32xf32>
    %31 = vector.broadcast %30 : vector<1x32xf32> to vector<2x32xf32>
    %32 = arith.addf %29, %31 : vector<2x32xf32>
    %c0_30 = arith.constant 0 : index
    %c0_31 = arith.constant 0 : index
    %33 = vector.load %arg10[%c0_30, %c0_31] : memref<2x32xf32, #tpu.memory_space<vmem>>, vector<2x32xf32>
    tpu.vector_store %arg10[%c0_30, %c0_31], %32 {strides = array<i32>} : memref<2x32xf32, #tpu.memory_space<vmem>>, vector<2x32xf32>,
    return
  }
  func.func @transform_0(%arg0: i32) -> (i32, i32) {
    %c0_i32 = arith.constant 0 : i32
    %c0_i32_0 = arith.constant 0 : i32
    return %arg0, %c0_i32 : i32, i32
  }
  func.func @transform_1(%arg0: i32) -> (i32, i32) {
    %c0_i32 = arith.constant 0 : i32
    %c0_i32_0 = arith.constant 0 : i32
    return %arg0, %c0_i32 : i32, i32
  }
  func.func @transform_2(%arg0: i32) -> (i32, i32) {
    %c0_i32 = arith.constant 0 : i32
    %c0_i32_0 = arith.constant 0 : i32
    return %arg0, %c0_i32 : i32, i32
  }
  func.func @transform_3(%arg0: i32) -> (i32, i32) {
    %c0_i32 = arith.constant 0 : i32
    %c0_i32_0 = arith.constant 0 : i32
    %c0_i32_1 = arith.constant 0 : i32
    return %c0_i32, %c0_i32_0 : i32, i32
  }
  func.func @transform_4(%arg0: i32) -> (i32, i32) {
    %c0_i32 = arith.constant 0 : i32
    %c0_i32_0 = arith.constant 0 : i32
    %c0_i32_1 = arith.constant 0 : i32
    return %c0_i32, %c0_i32_0 : i32, i32
  }
  func.func @transform_5(%arg0: i32) -> (i32, i32) {
    %c0_i32 = arith.constant 0 : i32
    %c0_i32_0 = arith.constant 0 : i32
    %c0_i32_1 = arith.constant 0 : i32
    return %c0_i32, %c0_i32_0 : i32, i32
  }
  func.func @transform_6(%arg0: i32) -> (i32, i32) {
    %c0_i32 = arith.constant 0 : i32
    %c0_i32_0 = arith.constant 0 : i32
    %c0_i32_1 = arith.constant 0 : i32
    return %c0_i32, %c0_i32_0 : i32, i32
  }
  func.func @transform_7(%arg0: i32) -> (i32, i32) {
    %c0_i32 = arith.constant 0 : i32
    %c0_i32_0 = arith.constant 0 : i32
    %c0_i32_1 = arith.constant 0 : i32
    return %c0_i32, %c0_i32_0 : i32, i32
  }
  func.func @transform_8(%arg0: i32) -> (i32, i32) {
    %c0_i32 = arith.constant 0 : i32
    %c0_i32_0 = arith.constant 0 : i32
    %c0_i32_1 = arith.constant 0 : i32
    return %c0_i32, %c0_i32_0 : i32, i32
  }
  func.func @transform_9(%arg0: i32) -> (i32, i32) {
    %c0_i32 = arith.constant 0 : i32
    %c0_i32_0 = arith.constant 0 : i32
    return %arg0, %c0_i32 : i32, i32
  }
}

</mosaic_0001>

<llo_original>
// kernel: tpu_custom_call.1
$region0: #{tpu_custom_call.1}
  #allocation0 [shape = 'u32[]', space=smem, size = 0x4, offset = 0x4, fixed_abs, tag = 'smem constant byte address 0x4 - core index']
  #allocation1 [shape = 'u32[144,128]{1,0:T(1,128)}', space=vmem, size = 0x12000, scoped, tag = 'internal scratch']
  %s0 = inlined_call_operand.hbm [shape: f32[2,32], index: 0, kind: input, shape index: {}]
  %s1 = inlined_call_operand.hbm [shape: f32[2,32], index: 1, kind: input, shape index: {}]
  %s2 = inlined_call_operand.vmem [shape: f32[2,32], index: 2, kind: input, shape index: {}]
  %s3 = inlined_call_operand.hbm [shape: f32[32,32], index: 3, kind: input, shape index: {}]
  %s4 = inlined_call_operand.hbm [shape: f32[32,32], index: 4, kind: input, shape index: {}]
  %s5 = inlined_call_operand.hbm [shape: f32[32,32], index: 5, kind: input, shape index: {}]
  %s6 = inlined_call_operand.hbm [shape: f32[32,32], index: 6, kind: input, shape index: {}]
  %s7 = inlined_call_operand.vmem [shape: f32[1,32], index: 7, kind: input, shape index: {}]
  %s8 = inlined_call_operand.hbm [shape: f32[32,32], index: 8, kind: input, shape index: {}]
  %s9 = inlined_call_operand.hbm [shape: f32[2,32], index: 9, kind: output, shape index: {}]
  %s10 = sld [smem:[#allocation0]]
  $region74: #{tpu_custom_call.1} parent=0
    _
  %s12 = ssub.s32 1, %s10
  %s13 = scalar_select 0, %s12, %s10
  $region1: #{tpu_custom_call.1} parent=0
    #allocation2 [shape = 'u8[1024]{0}', space=vmem, size = 0x400, scoped, tag = 'input window, operand 0, single buffered']
    #allocation3 [shape = 's32[1]{0}', space=sflag, size = 0x4, scoped, tag = 'scoped memory for tpu_custom_call.1']
    #allocation4 [shape = 's32[1]{0}', space=sflag, size = 0x4, scoped, tag = 'scoped memory for tpu_custom_call.1']
    #allocation5 [shape = 'u8[1024]{0}', space=vmem, size = 0x400, scoped, tag = 'input window, operand 1, single buffered']
    #allocation6 [shape = 's32[1]{0}', space=sflag, size = 0x4, scoped, tag = 'scoped memory for tpu_custom_call.1']
    #allocation7 [shape = 'u8[16384]{0}', space=vmem, size = 0x4000, scoped, tag = 'input window, operand 3, single buffered']
    #allocation8 [shape = 'u8[16384]{0}', space=vmem, size = 0x4000, scoped, tag = 'input window, operand 4, single buffered']
    #allocation9 [shape = 's32[1]{0}', space=sflag, size = 0x4, scoped, tag = 'scoped memory for tpu_custom_call.1']
    #allocation10 [shape = 'u8[16384]{0}', space=vmem, size = 0x4000, scoped, tag = 'input window, operand 5, single buffered']
    #allocation11 [shape = 'u8[16384]{0}', space=vmem, size = 0x4000, scoped, tag = 'input window, operand 6, single buffered']
    #allocation12 [shape = 's32[1]{0}', space=sflag, size = 0x4, scoped, tag = 'scoped memory for tpu_custom_call.1']
    #allocation13 [shape = 'u8[16384]{0}', space=vmem, size = 0x4000, scoped, tag = 'input window, operand 8, single buffered']
    #allocation14 [shape = 'u8[1024]{0}', space=vmem, size = 0x400, scoped, tag = 'output window, operand 0, single buffered']
    %14 = vsyncpa [#allocation3], 0
    %15 = vsyncpa [#allocation6], 0
    %16 = vsyncpa [#allocation9], 0
    %17 = vsyncpa [#allocation12], 0
    %18 = vsyncpa [#allocation4], 0
    // Predicated region
    $region2: #{tpu_custom_call.1} parent=1 // pred_check
      _
    $region3: #{tpu_custom_call.1} parent=1 // pred_check_branch
      %20 = sbr.rel (0) target = $region5
    $region4: #{tpu_custom_call.1} parent=1 // pred_region
      %s22 = ssub.s32 32, 32
      %23 = vsyncadd [#allocation3], %s22
      %s25 = sshll.u32 [#allocation2], 4
      %s26 = int_to_ptr.vmem [resolvable:$true] %s25
      %28 = dma.hbm_to_vmem [thread:$0]  %s0, 32, %s26, [#allocation3]
    $region5: #{tpu_custom_call.1} parent=1 // pred_fallthru
      _
    // Predicated region
    $region6: #{tpu_custom_call.1} parent=1 // pred_check
      _
    $region7: #{tpu_custom_call.1} parent=1 // pred_check_branch
      %30 = sbr.rel (0) target = $region9
    $region8: #{tpu_custom_call.1} parent=1 // pred_region
      %s32 = ssub.s32 32, 32
      %33 = vsyncadd [#allocation6], %s32
      %s35 = sshll.u32 [#allocation5], 4
      %s36 = int_to_ptr.vmem [resolvable:$true] %s35
      %38 = dma.hbm_to_vmem [thread:$0]  %s1, 32, %s36, [#allocation6]
    $region9: #{tpu_custom_call.1} parent=1 // pred_fallthru
      _
    // Predicated region
    $region10: #{tpu_custom_call.1} parent=1 // pred_check
      _
    $region11: #{tpu_custom_call.1} parent=1 // pred_check_branch
      %40 = sbr.rel (0) target = $region13
    $region12: #{tpu_custom_call.1} parent=1 // pred_region
      _
    $region13: #{tpu_custom_call.1} parent=1 // pred_fallthru
      _
    // Predicated region
    $region14: #{tpu_custom_call.1} parent=1 // pred_check
      _
    $region15: #{tpu_custom_call.1} parent=1 // pred_check_branch
      %42 = sbr.rel (0) target = $region17
    $region16: #{tpu_custom_call.1} parent=1 // pred_region
      %s44 = ssub.s32 512, 512
      %45 = vsyncadd [#allocation6], %s44
      %s46 = sshll.u32 [#allocation7], 4
      %s47 = int_to_ptr.vmem [resolvable:$true] %s46
      %52 = dma.hbm_to_vmem [thread:$0]  %s3, 512, %s47, [#allocation6], 128, 128, 8
    $region17: #{tpu_custom_call.1} parent=1 // pred_fallthru
      _
    // Predicated region
    $region18: #{tpu_custom_call.1} parent=1 // pred_check
      _
    $region19: #{tpu_custom_call.1} parent=1 // pred_check_branch
      %54 = sbr.rel (0) target = $region21
    $region20: #{tpu_custom_call.1} parent=1 // pred_region
      %s56 = ssub.s32 512, 512
      %57 = vsyncadd [#allocation9], %s56
      %s58 = sshll.u32 [#allocation8], 4
      %s59 = int_to_ptr.vmem [resolvable:$true] %s58
      %64 = dma.hbm_to_vmem [thread:$0]  %s4, 512, %s59, [#allocation9], 128, 128, 8
    $region21: #{tpu_custom_call.1} parent=1 // pred_fallthru
      _
    // Predicated region
    $region22: #{tpu_custom_call.1} parent=1 // pred_check
      _
    $region23: #{tpu_custom_call.1} parent=1 // pred_check_branch
      %66 = sbr.rel (0) target = $region25
    $region24: #{tpu_custom_call.1} parent=1 // pred_region
      %s68 = ssub.s32 512, 512
      %69 = vsyncadd [#allocation9], %s68
      %s70 = sshll.u32 [#allocation10], 4
      %s71 = int_to_ptr.vmem [resolvable:$true] %s70
      %76 = dma.hbm_to_vmem [thread:$0]  %s5, 512, %s71, [#allocation9], 128, 128, 8
    $region25: #{tpu_custom_call.1} parent=1 // pred_fallthru
      _
    // Predicated region
    $region26: #{tpu_custom_call.1} parent=1 // pred_check
      _
    $region27: #{tpu_custom_call.1} parent=1 // pred_check_branch
      %78 = sbr.rel (0) target = $region29
    $region28: #{tpu_custom_call.1} parent=1 // pred_region
      %s80 = ssub.s32 512, 512
      %81 = vsyncadd [#allocation12], %s80
      %s82 = sshll.u32 [#allocation11], 4
      %s83 = int_to_ptr.vmem [resolvable:$true] %s82
      %88 = dma.hbm_to_vmem [thread:$0]  %s6, 512, %s83, [#allocation12], 128, 128, 8
    $region29: #{tpu_custom_call.1} parent=1 // pred_fallthru
      _
    // Predicated region
    $region30: #{tpu_custom_call.1} parent=1 // pred_check
      _
    $region31: #{tpu_custom_call.1} parent=1 // pred_check_branch
      %90 = sbr.rel (0) target = $region33
    $region32: #{tpu_custom_call.1} parent=1 // pred_region
      _
    $region33: #{tpu_custom_call.1} parent=1 // pred_fallthru
      _
    // Predicated region
    $region34: #{tpu_custom_call.1} parent=1 // pred_check
      _
    $region35: #{tpu_custom_call.1} parent=1 // pred_check_branch
      %92 = sbr.rel (0) target = $region37
    $region36: #{tpu_custom_call.1} parent=1 // pred_region
      %s94 = ssub.s32 512, 512
      %95 = vsyncadd [#allocation12], %s94
      %s96 = sshll.u32 [#allocation13], 4
      %s97 = int_to_ptr.vmem [resolvable:$true] %s96
      %102 = dma.hbm_to_vmem [thread:$0]  %s8, 512, %s97, [#allocation12], 128, 128, 8
    $region37: #{tpu_custom_call.1} parent=1 // pred_fallthru
      _
    // Predicated region
    $region38: #{tpu_custom_call.1} parent=1 // pred_check
      _
    $region39: #{tpu_custom_call.1} parent=1 // pred_check_branch
      %104 = sbr.rel (0) target = $region41
    $region40: #{tpu_custom_call.1} parent=1 // pred_region
      %105 = dma.done [#allocation3], 32
    $region41: #{tpu_custom_call.1} parent=1 // pred_fallthru
      _
    // Predicated region
    $region42: #{tpu_custom_call.1} parent=1 // pred_check
      _
    $region43: #{tpu_custom_call.1} parent=1 // pred_check_branch
      %107 = sbr.rel (0) target = $region45
    $region44: #{tpu_custom_call.1} parent=1 // pred_region
      %108 = dma.done [#allocation6], 32
    $region45: #{tpu_custom_call.1} parent=1 // pred_fallthru
      _
    // Predicated region
    $region46: #{tpu_custom_call.1} parent=1 // pred_check
      _
    $region47: #{tpu_custom_call.1} parent=1 // pred_check_branch
      %110 = sbr.rel (0) target = $region49
    $region48: #{tpu_custom_call.1} parent=1 // pred_region
      %111 = dma.done [#allocation6], 512
    $region49: #{tpu_custom_call.1} parent=1 // pred_fallthru
      _
    // Predicated region
    $region50: #{tpu_custom_call.1} parent=1 // pred_check
      _
    $region51: #{tpu_custom_call.1} parent=1 // pred_check_branch
      %113 = sbr.rel (0) target = $region53
    $region52: #{tpu_custom_call.1} parent=1 // pred_region
      %114 = dma.done [#allocation9], 512
    $region53: #{tpu_custom_call.1} parent=1 // pred_fallthru
      _
    // Predicated region
    $region54: #{tpu_custom_call.1} parent=1 // pred_check
      _
    $region55: #{tpu_custom_call.1} parent=1 // pred_check_branch
      %116 = sbr.rel (0) target = $region57
    $region56: #{tpu_custom_call.1} parent=1 // pred_region
      %117 = dma.done [#allocation9], 512
    $region57: #{tpu_custom_call.1} parent=1 // pred_fallthru
      _
    // Predicated region
    $region58: #{tpu_custom_call.1} parent=1 // pred_check
      _
    $region59: #{tpu_custom_call.1} parent=1 // pred_check_branch
      %119 = sbr.rel (0) target = $region61
    $region60: #{tpu_custom_call.1} parent=1 // pred_region
      %120 = dma.done [#allocation12], 512
    $region61: #{tpu_custom_call.1} parent=1 // pred_fallthru
      _
    // Predicated region
    $region62: #{tpu_custom_call.1} parent=1 // pred_check
      _
    $region63: #{tpu_custom_call.1} parent=1 // pred_check_branch
      %122 = sbr.rel (0) target = $region65
    $region64: #{tpu_custom_call.1} parent=1 // pred_region
      %123 = dma.done [#allocation12], 512
    $region65: #{tpu_custom_call.1} parent=1 // pred_fallthru
      _
    %v124 = vld [vmem:[#allocation2] sm:$0x3]
    %v125 = vld [vmem:[#allocation5] sm:$0x3]
    %v126 = vld [vmem:[%s2] sm:$0x3]
    %v127 = vld [vmem:[#allocation7] sm:$0xff]
    %v128 = vld [vmem:[#allocation7 + $0x8] sm:$0xff]
    %v129 = vld [vmem:[#allocation7 + $0x10] sm:$0xff]
    %v130 = vld [vmem:[#allocation7 + $0x18] sm:$0xff]
    %vm131 = vcmask 261120
    %v133 = vsel %vm131, %v126, 0
    %135 = vmatprep.subr.mxu0 0.0
    %136 = vmatpush1.msra.mxu0 0.0
    %137 = vmatprep.subr.mxu0 0.0
    %138 = vmatpush1.msra.mxu0 0.0
    %139 = vmatprep.subr.mxu0 0.0
    %140 = vmatpush1.msra.mxu0 0.0
    %141 = vmatprep.subr.mxu0 0.0
    %142 = vmatpush1.msra.mxu0 0.0
    %143 = vmatprep.subr.mxu0 0.0
    %144 = vmatpush1.msra.mxu0 0.0
    %145 = vmatprep.subr.mxu0 0.0
    %146 = vmatpush1.msra.mxu0 0.0
    %147 = vmatprep.subr.mxu0 0.0
    %148 = vmatpush1.msra.mxu0 0.0
    %149 = vmatprep.subr.mxu0 0.0
    %150 = vmatpush1.msra.mxu0 0.0
    %151 = vmatprep.subr.mxu0 0.0
    %152 = vmatpush1.msra.mxu0 0.0
    %153 = vmatprep.subr.mxu0 0.0
    %154 = vmatpush1.msra.mxu0 0.0
    %155 = vmatprep.subr.mxu0 0.0
    %156 = vmatpush1.msra.mxu0 0.0
    %157 = vmatprep.subr.mxu0 0.0
    %158 = vmatpush1.msra.mxu0 0.0
    %159 = vmatprep.subr.mxu0 0.0
    %160 = vmatpush1.msra.mxu0 %v130
    %161 = vmatprep.subr.mxu0 0.0
    %162 = vmatpush1.msra.mxu0 %v129
    %163 = vmatprep.subr.mxu0 0.0
    %164 = vmatpush1.msra.mxu0 %v128
    %165 = vmatprep.subr.mxu0 0.0
    %166 = vmatpush1.msra.mxu0 %v127
    %167 = vmatprep.subr.mxu0 0.0
    %168 = vmatpush2.msra.mxu0 0.0
    %169 = vmatprep.subr.mxu0 0.0
    %170 = vmatpush2.msra.mxu0 0.0
    %171 = vmatprep.subr.mxu0 0.0
    %172 = vmatpush2.msra.mxu0 0.0
    %173 = vmatprep.subr.mxu0 0.0
    %174 = vmatpush2.msra.mxu0 0.0
    %175 = vmatprep.subr.mxu0 0.0
    %176 = vmatpush2.msra.mxu0 0.0
    %177 = vmatprep.subr.mxu0 0.0
    %178 = vmatpush2.msra.mxu0 0.0
    %179 = vmatprep.subr.mxu0 0.0
    %180 = vmatpush2.msra.mxu0 0.0
    %181 = vmatprep.subr.mxu0 0.0
    %182 = vmatpush2.msra.mxu0 0.0
    %183 = vmatprep.subr.mxu0 0.0
    %184 = vmatpush2.msra.mxu0 0.0
    %185 = vmatprep.subr.mxu0 0.0
    %186 = vmatpush2.msra.mxu0 0.0
    %187 = vmatprep.subr.mxu0 0.0
    %188 = vmatpush2.msra.mxu0 0.0
    %189 = vmatprep.subr.mxu0 0.0
    %190 = vmatpush2.msra.mxu0 0.0
    %191 = vmatprep.subr.mxu0 0.0
    %192 = vmatpush2.msra.mxu0 0.0
    %193 = vmatprep.subr.mxu0 0.0
    %194 = vmatpush2.msra.mxu0 0.0
    %195 = vmatprep.subr.mxu0 0.0
    %196 = vmatpush2.msra.mxu0 0.0
    %197 = vmatprep.subr.mxu0 0.0
    %198 = vmatpush2.msra.mxu0 0.0
    %199 = vmatprep.mubr.f32.mxu0 0.0
    %200 = vmatmul.mubr.f32.gmra.mxu0 %v133
    %v201 = vpop.f32.mrf.mxu0
    %v202 = vadd.f32 0.0, %v201
    %v203 = vpop.f32.mrf.mxu0
    %204 = vdwg.mxu0
    %v205 = vld [vmem:[#allocation8] sm:$0xff]
    %v206 = vld [vmem:[#allocation8 + $0x8] sm:$0xff]
    %v207 = vld [vmem:[#allocation8 + $0x10] sm:$0xff]
    %v208 = vld [vmem:[#allocation8 + $0x18] sm:$0xff]
    %v210 = vsel %vm131, %v124, 0
    %212 = vmatprep.subr.mxu0 0.0
    %213 = vmatpush1.msra.mxu0 0.0
    %214 = vmatprep.subr.mxu0 0.0
    %215 = vmatpush1.msra.mxu0 0.0
    %216 = vmatprep.subr.mxu0 0.0
    %217 = vmatpush1.msra.mxu0 0.0
    %218 = vmatprep.subr.mxu0 0.0
    %219 = vmatpush1.msra.mxu0 0.0
    %220 = vmatprep.subr.mxu0 0.0
    %221 = vmatpush1.msra.mxu0 0.0
    %222 = vmatprep.subr.mxu0 0.0
    %223 = vmatpush1.msra.mxu0 0.0
    %224 = vmatprep.subr.mxu0 0.0
    %225 = vmatpush1.msra.mxu0 0.0
    %226 = vmatprep.subr.mxu0 0.0
    %227 = vmatpush1.msra.mxu0 0.0
    %228 = vmatprep.subr.mxu0 0.0
    %229 = vmatpush1.msra.mxu0 0.0
    %230 = vmatprep.subr.mxu0 0.0
    %231 = vmatpush1.msra.mxu0 0.0
    %232 = vmatprep.subr.mxu0 0.0
    %233 = vmatpush1.msra.mxu0 0.0
    %234 = vmatprep.subr.mxu0 0.0
    %235 = vmatpush1.msra.mxu0 0.0
    %236 = vmatprep.subr.mxu0 0.0
    %237 = vmatpush1.msra.mxu0 %v208
    %238 = vmatprep.subr.mxu0 0.0
    %239 = vmatpush1.msra.mxu0 %v207
    %240 = vmatprep.subr.mxu0 0.0
    %241 = vmatpush1.msra.mxu0 %v206
    %242 = vmatprep.subr.mxu0 0.0
    %243 = vmatpush1.msra.mxu0 %v205
    %244 = vmatprep.subr.mxu0 0.0
    %245 = vmatpush2.msra.mxu0 0.0
    %246 = vmatprep.subr.mxu0 0.0
    %247 = vmatpush2.msra.mxu0 0.0
    %248 = vmatprep.subr.mxu0 0.0
    %249 = vmatpush2.msra.mxu0 0.0
    %250 = vmatprep.subr.mxu0 0.0
    %251 = vmatpush2.msra.mxu0 0.0
    %252 = vmatprep.subr.mxu0 0.0
    %253 = vmatpush2.msra.mxu0 0.0
    %254 = vmatprep.subr.mxu0 0.0
    %255 = vmatpush2.msra.mxu0 0.0
    %256 = vmatprep.subr.mxu0 0.0
    %257 = vmatpush2.msra.mxu0 0.0
    %258 = vmatprep.subr.mxu0 0.0
    %259 = vmatpush2.msra.mxu0 0.0
    %260 = vmatprep.subr.mxu0 0.0
    %261 = vmatpush2.msra.mxu0 0.0
    %262 = vmatprep.subr.mxu0 0.0
    %263 = vmatpush2.msra.mxu0 0.0
    %264 = vmatprep.subr.mxu0 0.0
    %265 = vmatpush2.msra.mxu0 0.0
    %266 = vmatprep.subr.mxu0 0.0
    %267 = vmatpush2.msra.mxu0 0.0
    %268 = vmatprep.subr.mxu0 0.0
    %269 = vmatpush2.msra.mxu0 0.0
    %270 = vmatprep.subr.mxu0 0.0
    %271 = vmatpush2.msra.mxu0 0.0
    %272 = vmatprep.subr.mxu0 0.0
    %273 = vmatpush2.msra.mxu0 0.0
    %274 = vmatprep.subr.mxu0 0.0
    %275 = vmatpush2.msra.mxu0 0.0
    %276 = vmatprep.mubr.f32.mxu0 0.0
    %277 = vmatmul.mubr.f32.gmra.mxu0 %v210
    %v278 = vpop.f32.mrf.mxu0
    %v279 = vadd.f32 0.0, %v278
    %v280 = vpop.f32.mrf.mxu0
    %281 = vdwg.mxu0
    %v283 = vsel %vm131, %v125, 0
    %285 = vmatprep.subr.mxu0 0.0
    %286 = vmatpush1.msra.mxu0 0.0
    %287 = vmatprep.subr.mxu0 0.0
    %288 = vmatpush1.msra.mxu0 0.0
    %289 = vmatprep.subr.mxu0 0.0
    %290 = vmatpush1.msra.mxu0 0.0
    %291 = vmatprep.subr.mxu0 0.0
    %292 = vmatpush1.msra.mxu0 0.0
    %293 = vmatprep.subr.mxu0 0.0
    %294 = vmatpush1.msra.mxu0 0.0
    %295 = vmatprep.subr.mxu0 0.0
    %296 = vmatpush1.msra.mxu0 0.0
    %297 = vmatprep.subr.mxu0 0.0
    %298 = vmatpush1.msra.mxu0 0.0
    %299 = vmatprep.subr.mxu0 0.0
    %300 = vmatpush1.msra.mxu0 0.0
    %301 = vmatprep.subr.mxu0 0.0
    %302 = vmatpush1.msra.mxu0 0.0
    %303 = vmatprep.subr.mxu0 0.0
    %304 = vmatpush1.msra.mxu0 0.0
    %305 = vmatprep.subr.mxu0 0.0
    %306 = vmatpush1.msra.mxu0 0.0
    %307 = vmatprep.subr.mxu0 0.0
    %308 = vmatpush1.msra.mxu0 0.0
    %309 = vmatprep.subr.mxu0 0.0
    %310 = vmatpush1.msra.mxu0 %v208
    %311 = vmatprep.subr.mxu0 0.0
    %312 = vmatpush1.msra.mxu0 %v207
    %313 = vmatprep.subr.mxu0 0.0
    %314 = vmatpush1.msra.mxu0 %v206
    %315 = vmatprep.subr.mxu0 0.0
    %316 = vmatpush1.msra.mxu0 %v205
    %317 = vmatprep.subr.mxu0 0.0
    %318 = vmatpush2.msra.mxu0 0.0
    %319 = vmatprep.subr.mxu0 0.0
    %320 = vmatpush2.msra.mxu0 0.0
    %321 = vmatprep.subr.mxu0 0.0
    %322 = vmatpush2.msra.mxu0 0.0
    %323 = vmatprep.subr.mxu0 0.0
    %324 = vmatpush2.msra.mxu0 0.0
    %325 = vmatprep.subr.mxu0 0.0
    %326 = vmatpush2.msra.mxu0 0.0
    %327 = vmatprep.subr.mxu0 0.0
    %328 = vmatpush2.msra.mxu0 0.0
    %329 = vmatprep.subr.mxu0 0.0
    %330 = vmatpush2.msra.mxu0 0.0
    %331 = vmatprep.subr.mxu0 0.0
    %332 = vmatpush2.msra.mxu0 0.0
    %333 = vmatprep.subr.mxu0 0.0
    %334 = vmatpush2.msra.mxu0 0.0
    %335 = vmatprep.subr.mxu0 0.0
    %336 = vmatpush2.msra.mxu0 0.0
    %337 = vmatprep.subr.mxu0 0.0
    %338 = vmatpush2.msra.mxu0 0.0
    %339 = vmatprep.subr.mxu0 0.0
    %340 = vmatpush2.msra.mxu0 0.0
    %341 = vmatprep.subr.mxu0 0.0
    %342 = vmatpush2.msra.mxu0 0.0
    %343 = vmatprep.subr.mxu0 0.0
    %344 = vmatpush2.msra.mxu0 0.0
    %345 = vmatprep.subr.mxu0 0.0
    %346 = vmatpush2.msra.mxu0 0.0
    %347 = vmatprep.subr.mxu0 0.0
    %348 = vmatpush2.msra.mxu0 0.0
    %349 = vmatprep.mubr.f32.mxu0 0.0
    %350 = vmatmul.mubr.f32.gmra.mxu0 %v283
    %v351 = vpop.f32.mrf.mxu0
    %v352 = vadd.f32 0.0, %v351
    %v353 = vpop.f32.mrf.mxu0
    %354 = vdwg.mxu0
    %v355 = vld [vmem:[#allocation10] sm:$0xff]
    %v356 = vld [vmem:[#allocation10 + $0x8] sm:$0xff]
    %v357 = vld [vmem:[#allocation10 + $0x10] sm:$0xff]
    %v358 = vld [vmem:[#allocation10 + $0x18] sm:$0xff]
    %359 = vmatprep.subr.mxu0 0.0
    %360 = vmatpush1.msra.mxu0 0.0
    %361 = vmatprep.subr.mxu0 0.0
    %362 = vmatpush1.msra.mxu0 0.0
    %363 = vmatprep.subr.mxu0 0.0
    %364 = vmatpush1.msra.mxu0 0.0
    %365 = vmatprep.subr.mxu0 0.0
    %366 = vmatpush1.msra.mxu0 0.0
    %367 = vmatprep.subr.mxu0 0.0
    %368 = vmatpush1.msra.mxu0 0.0
    %369 = vmatprep.subr.mxu0 0.0
    %370 = vmatpush1.msra.mxu0 0.0
    %371 = vmatprep.subr.mxu0 0.0
    %372 = vmatpush1.msra.mxu0 0.0
    %373 = vmatprep.subr.mxu0 0.0
    %374 = vmatpush1.msra.mxu0 0.0
    %375 = vmatprep.subr.mxu0 0.0
    %376 = vmatpush1.msra.mxu0 0.0
    %377 = vmatprep.subr.mxu0 0.0
    %378 = vmatpush1.msra.mxu0 0.0
    %379 = vmatprep.subr.mxu0 0.0
    %380 = vmatpush1.msra.mxu0 0.0
    %381 = vmatprep.subr.mxu0 0.0
    %382 = vmatpush1.msra.mxu0 0.0
    %383 = vmatprep.subr.mxu0 0.0
    %384 = vmatpush1.msra.mxu0 %v358
    %385 = vmatprep.subr.mxu0 0.0
    %386 = vmatpush1.msra.mxu0 %v357
    %387 = vmatprep.subr.mxu0 0.0
    %388 = vmatpush1.msra.mxu0 %v356
    %389 = vmatprep.subr.mxu0 0.0
    %390 = vmatpush1.msra.mxu0 %v355
    %391 = vmatprep.subr.mxu0 0.0
    %392 = vmatpush2.msra.mxu0 0.0
    %393 = vmatprep.subr.mxu0 0.0
    %394 = vmatpush2.msra.mxu0 0.0
    %395 = vmatprep.subr.mxu0 0.0
    %396 = vmatpush2.msra.mxu0 0.0
    %397 = vmatprep.subr.mxu0 0.0
    %398 = vmatpush2.msra.mxu0 0.0
    %399 = vmatprep.subr.mxu0 0.0
    %400 = vmatpush2.msra.mxu0 0.0
    %401 = vmatprep.subr.mxu0 0.0
    %402 = vmatpush2.msra.mxu0 0.0
    %403 = vmatprep.subr.mxu0 0.0
    %404 = vmatpush2.msra.mxu0 0.0
    %405 = vmatprep.subr.mxu0 0.0
    %406 = vmatpush2.msra.mxu0 0.0
    %407 = vmatprep.subr.mxu0 0.0
    %408 = vmatpush2.msra.mxu0 0.0
    %409 = vmatprep.subr.mxu0 0.0
    %410 = vmatpush2.msra.mxu0 0.0
    %411 = vmatprep.subr.mxu0 0.0
    %412 = vmatpush2.msra.mxu0 0.0
    %413 = vmatprep.subr.mxu0 0.0
    %414 = vmatpush2.msra.mxu0 0.0
    %415 = vmatprep.subr.mxu0 0.0
    %416 = vmatpush2.msra.mxu0 0.0
    %417 = vmatprep.subr.mxu0 0.0
    %418 = vmatpush2.msra.mxu0 0.0
    %419 = vmatprep.subr.mxu0 0.0
    %420 = vmatpush2.msra.mxu0 0.0
    %421 = vmatprep.subr.mxu0 0.0
    %422 = vmatpush2.msra.mxu0 0.0
    %423 = vmatprep.mubr.f32.mxu0 0.0
    %424 = vmatmul.mubr.f32.gmra.mxu0 %v210
    %v425 = vpop.f32.mrf.mxu0
    %v426 = vadd.f32 0.0, %v425
    %v427 = vpop.f32.mrf.mxu0
    %428 = vdwg.mxu0
    %429 = vmatprep.subr.mxu0 0.0
    %430 = vmatpush1.msra.mxu0 0.0
    %431 = vmatprep.subr.mxu0 0.0
    %432 = vmatpush1.msra.mxu0 0.0
    %433 = vmatprep.subr.mxu0 0.0
    %434 = vmatpush1.msra.mxu0 0.0
    %435 = vmatprep.subr.mxu0 0.0
    %436 = vmatpush1.msra.mxu0 0.0
    %437 = vmatprep.subr.mxu0 0.0
    %438 = vmatpush1.msra.mxu0 0.0
    %439 = vmatprep.subr.mxu0 0.0
    %440 = vmatpush1.msra.mxu0 0.0
    %441 = vmatprep.subr.mxu0 0.0
    %442 = vmatpush1.msra.mxu0 0.0
    %443 = vmatprep.subr.mxu0 0.0
    %444 = vmatpush1.msra.mxu0 0.0
    %445 = vmatprep.subr.mxu0 0.0
    %446 = vmatpush1.msra.mxu0 0.0
    %447 = vmatprep.subr.mxu0 0.0
    %448 = vmatpush1.msra.mxu0 0.0
    %449 = vmatprep.subr.mxu0 0.0
    %450 = vmatpush1.msra.mxu0 0.0
    %451 = vmatprep.subr.mxu0 0.0
    %452 = vmatpush1.msra.mxu0 0.0
    %453 = vmatprep.subr.mxu0 0.0
    %454 = vmatpush1.msra.mxu0 %v358
    %455 = vmatprep.subr.mxu0 0.0
    %456 = vmatpush1.msra.mxu0 %v357
    %457 = vmatprep.subr.mxu0 0.0
    %458 = vmatpush1.msra.mxu0 %v356
    %459 = vmatprep.subr.mxu0 0.0
    %460 = vmatpush1.msra.mxu0 %v355
    %461 = vmatprep.subr.mxu0 0.0
    %462 = vmatpush2.msra.mxu0 0.0
    %463 = vmatprep.subr.mxu0 0.0
    %464 = vmatpush2.msra.mxu0 0.0
    %465 = vmatprep.subr.mxu0 0.0
    %466 = vmatpush2.msra.mxu0 0.0
    %467 = vmatprep.subr.mxu0 0.0
    %468 = vmatpush2.msra.mxu0 0.0
    %469 = vmatprep.subr.mxu0 0.0
    %470 = vmatpush2.msra.mxu0 0.0
    %471 = vmatprep.subr.mxu0 0.0
    %472 = vmatpush2.msra.mxu0 0.0
    %473 = vmatprep.subr.mxu0 0.0
    %474 = vmatpush2.msra.mxu0 0.0
    %475 = vmatprep.subr.mxu0 0.0
    %476 = vmatpush2.msra.mxu0 0.0
    %477 = vmatprep.subr.mxu0 0.0
    %478 = vmatpush2.msra.mxu0 0.0
    %479 = vmatprep.subr.mxu0 0.0
    %480 = vmatpush2.msra.mxu0 0.0
    %481 = vmatprep.subr.mxu0 0.0
    %482 = vmatpush2.msra.mxu0 0.0
    %483 = vmatprep.subr.mxu0 0.0
    %484 = vmatpush2.msra.mxu0 0.0
    %485 = vmatprep.subr.mxu0 0.0
    %486 = vmatpush2.msra.mxu0 0.0
    %487 = vmatprep.subr.mxu0 0.0
    %488 = vmatpush2.msra.mxu0 0.0
    %489 = vmatprep.subr.mxu0 0.0
    %490 = vmatpush2.msra.mxu0 0.0
    %491 = vmatprep.subr.mxu0 0.0
    %492 = vmatpush2.msra.mxu0 0.0
    %493 = vmatprep.mubr.f32.mxu0 0.0
    %494 = vmatmul.mubr.f32.gmra.mxu0 %v283
    %v495 = vpop.f32.mrf.mxu0
    %v496 = vadd.f32 0.0, %v495
    %v497 = vpop.f32.mrf.mxu0
    %498 = vdwg.mxu0
    %v499 = vsub.f32 %v279, %v352
    %v500 = vmul.f32 %v202, %v499
    %v501 = vld [vmem:[#allocation13] sm:$0xff]
    %v502 = vld [vmem:[#allocation13 + $0x8] sm:$0xff]
    %v503 = vld [vmem:[#allocation13 + $0x10] sm:$0xff]
    %v504 = vld [vmem:[#allocation13 + $0x18] sm:$0xff]
    %v506 = vsel %vm131, %v500, 0
    %508 = vmatprep.subr.mxu0 0.0
    %509 = vmatpush1.msra.mxu0 0.0
    %510 = vmatprep.subr.mxu0 0.0
    %511 = vmatpush1.msra.mxu0 0.0
    %512 = vmatprep.subr.mxu0 0.0
    %513 = vmatpush1.msra.mxu0 0.0
    %514 = vmatprep.subr.mxu0 0.0
    %515 = vmatpush1.msra.mxu0 0.0
    %516 = vmatprep.subr.mxu0 0.0
    %517 = vmatpush1.msra.mxu0 0.0
    %518 = vmatprep.subr.mxu0 0.0
    %519 = vmatpush1.msra.mxu0 0.0
    %520 = vmatprep.subr.mxu0 0.0
    %521 = vmatpush1.msra.mxu0 0.0
    %522 = vmatprep.subr.mxu0 0.0
    %523 = vmatpush1.msra.mxu0 0.0
    %524 = vmatprep.subr.mxu0 0.0
    %525 = vmatpush1.msra.mxu0 0.0
    %526 = vmatprep.subr.mxu0 0.0
    %527 = vmatpush1.msra.mxu0 0.0
    %528 = vmatprep.subr.mxu0 0.0
    %529 = vmatpush1.msra.mxu0 0.0
    %530 = vmatprep.subr.mxu0 0.0
    %531 = vmatpush1.msra.mxu0 0.0
    %532 = vmatprep.subr.mxu0 0.0
    %533 = vmatpush1.msra.mxu0 %v504
    %534 = vmatprep.subr.mxu0 0.0
    %535 = vmatpush1.msra.mxu0 %v503
    %536 = vmatprep.subr.mxu0 0.0
    %537 = vmatpush1.msra.mxu0 %v502
    %538 = vmatprep.subr.mxu0 0.0
    %539 = vmatpush1.msra.mxu0 %v501
    %540 = vmatprep.subr.mxu0 0.0
    %541 = vmatpush2.msra.mxu0 0.0
    %542 = vmatprep.subr.mxu0 0.0
    %543 = vmatpush2.msra.mxu0 0.0
    %544 = vmatprep.subr.mxu0 0.0
    %545 = vmatpush2.msra.mxu0 0.0
    %546 = vmatprep.subr.mxu0 0.0
    %547 = vmatpush2.msra.mxu0 0.0
    %548 = vmatprep.subr.mxu0 0.0
    %549 = vmatpush2.msra.mxu0 0.0
    %550 = vmatprep.subr.mxu0 0.0
    %551 = vmatpush2.msra.mxu0 0.0
    %552 = vmatprep.subr.mxu0 0.0
    %553 = vmatpush2.msra.mxu0 0.0
    %554 = vmatprep.subr.mxu0 0.0
    %555 = vmatpush2.msra.mxu0 0.0
    %556 = vmatprep.subr.mxu0 0.0
    %557 = vmatpush2.msra.mxu0 0.0
    %558 = vmatprep.subr.mxu0 0.0
    %559 = vmatpush2.msra.mxu0 0.0
    %560 = vmatprep.subr.mxu0 0.0
    %561 = vmatpush2.msra.mxu0 0.0
    %562 = vmatprep.subr.mxu0 0.0
    %563 = vmatpush2.msra.mxu0 0.0
    %564 = vmatprep.subr.mxu0 0.0
    %565 = vmatpush2.msra.mxu0 0.0
    %566 = vmatprep.subr.mxu0 0.0
    %567 = vmatpush2.msra.mxu0 0.0
    %568 = vmatprep.subr.mxu0 0.0
    %569 = vmatpush2.msra.mxu0 0.0
    %570 = vmatprep.subr.mxu0 0.0
    %571 = vmatpush2.msra.mxu0 0.0
    %572 = vmatprep.mubr.f32.mxu0 0.0
    %573 = vmatmul.mubr.f32.gmra.mxu0 %v506
    %v574 = vpop.f32.mrf.mxu0
    %v575 = vadd.f32 0.0, %v574
    %v576 = vpop.f32.mrf.mxu0
    %577 = vdwg.mxu0
    %v578 = vmul.f32 %v575, 0.125
    %v579 = vsub.f32 0.0, %v578
    %v580 = vmul.f32 %v579, 1.442695
    %v581 = vpow.pop %v580
    %v582 = vadd.f32 %v581, 1.0
    %v583 = vrcp.pop %v582
    %v584 = vsub.f32 %v426, %v496
    %v585 = vmul.f32 %v583, %v584
    %v586 = vadd.f32 %v496, %v585
    %v587 = vld [vmem:[#allocation11] sm:$0xff]
    %v588 = vld [vmem:[#allocation11 + $0x8] sm:$0xff]
    %v589 = vld [vmem:[#allocation11 + $0x10] sm:$0xff]
    %v590 = vld [vmem:[#allocation11 + $0x18] sm:$0xff]
    %v591 = vld [vmem:[%s7] sm:$0x1]
    %v593 = vlaneseq
    %v594 = vshrl.u32 %v593, 7
    %v595 = vsub.s32 0, %v594
    %v596 = vrot.slane %v591, %v595
    %v599 = vsel %vm131, %v586, 0
    %601 = vmatprep.subr.mxu0 0.0
    %602 = vmatpush1.msra.mxu0 0.0
    %603 = vmatprep.subr.mxu0 0.0
    %604 = vmatpush1.msra.mxu0 0.0
    %605 = vmatprep.subr.mxu0 0.0
    %606 = vmatpush1.msra.mxu0 0.0
    %607 = vmatprep.subr.mxu0 0.0
    %608 = vmatpush1.msra.mxu0 0.0
    %609 = vmatprep.subr.mxu0 0.0
    %610 = vmatpush1.msra.mxu0 0.0
    %611 = vmatprep.subr.mxu0 0.0
    %612 = vmatpush1.msra.mxu0 0.0
    %613 = vmatprep.subr.mxu0 0.0
    %614 = vmatpush1.msra.mxu0 0.0
    %615 = vmatprep.subr.mxu0 0.0
    %616 = vmatpush1.msra.mxu0 0.0
    %617 = vmatprep.subr.mxu0 0.0
    %618 = vmatpush1.msra.mxu0 0.0
    %619 = vmatprep.subr.mxu0 0.0
    %620 = vmatpush1.msra.mxu0 0.0
    %621 = vmatprep.subr.mxu0 0.0
    %622 = vmatpush1.msra.mxu0 0.0
    %623 = vmatprep.subr.mxu0 0.0
    %624 = vmatpush1.msra.mxu0 0.0
    %625 = vmatprep.subr.mxu0 0.0
    %626 = vmatpush1.msra.mxu0 %v590
    %627 = vmatprep.subr.mxu0 0.0
    %628 = vmatpush1.msra.mxu0 %v589
    %629 = vmatprep.subr.mxu0 0.0
    %630 = vmatpush1.msra.mxu0 %v588
    %631 = vmatprep.subr.mxu0 0.0
    %632 = vmatpush1.msra.mxu0 %v587
    %633 = vmatprep.subr.mxu0 0.0
    %634 = vmatpush2.msra.mxu0 0.0
    %635 = vmatprep.subr.mxu0 0.0
    %636 = vmatpush2.msra.mxu0 0.0
    %637 = vmatprep.subr.mxu0 0.0
    %638 = vmatpush2.msra.mxu0 0.0
    %639 = vmatprep.subr.mxu0 0.0
    %640 = vmatpush2.msra.mxu0 0.0
    %641 = vmatprep.subr.mxu0 0.0
    %642 = vmatpush2.msra.mxu0 0.0
    %643 = vmatprep.subr.mxu0 0.0
    %644 = vmatpush2.msra.mxu0 0.0
    %645 = vmatprep.subr.mxu0 0.0
    %646 = vmatpush2.msra.mxu0 0.0
    %647 = vmatprep.subr.mxu0 0.0
    %648 = vmatpush2.msra.mxu0 0.0
    %649 = vmatprep.subr.mxu0 0.0
    %650 = vmatpush2.msra.mxu0 0.0
    %651 = vmatprep.subr.mxu0 0.0
    %652 = vmatpush2.msra.mxu0 0.0
    %653 = vmatprep.subr.mxu0 0.0
    %654 = vmatpush2.msra.mxu0 0.0
    %655 = vmatprep.subr.mxu0 0.0
    %656 = vmatpush2.msra.mxu0 0.0
    %657 = vmatprep.subr.mxu0 0.0
    %658 = vmatpush2.msra.mxu0 0.0
    %659 = vmatprep.subr.mxu0 0.0
    %660 = vmatpush2.msra.mxu0 0.0
    %661 = vmatprep.subr.mxu0 0.0
    %662 = vmatpush2.msra.mxu0 0.0
    %663 = vmatprep.subr.mxu0 0.0
    %664 = vmatpush2.msra.mxu0 0.0
    %665 = vmatprep.mubr.f32.mxu0 0.0
    %666 = vmatmul.mubr.f32.gmra.mxu0 %v599
    %v667 = vpop.f32.mrf.mxu0
    %v668 = vadd.f32 %v596, %v667
    %v669 = vpop.f32.mrf.mxu0
    %670 = vdwg.mxu0
    %vm671 = vcmask 254976
    %672 = vst.msk [vmem:[#allocation14] sm:$0x3] %vm671, %v668
    // Predicated region
    $region66: #{tpu_custom_call.1} parent=1 // pred_check
      _
    $region67: #{tpu_custom_call.1} parent=1 // pred_check_branch
      %674 = sbr.rel (0) target = $region69
    $region68: #{tpu_custom_call.1} parent=1 // pred_region
      %s676 = ssub.s32 32, 32
      %677 = vsyncadd [#allocation4], %s676
      %s679 = sshll.u32 [#allocation14], 4
      %s680 = int_to_ptr.vmem [resolvable:$true] %s679
      %682 = dma.vmem_to_hbm [thread:$0]  %s680, 32, %s9, [#allocation4]
    $region69: #{tpu_custom_call.1} parent=1 // pred_fallthru
      _
    // Predicated region
    $region70: #{tpu_custom_call.1} parent=1 // pred_check
      _
    $region71: #{tpu_custom_call.1} parent=1 // pred_check_branch
      %684 = sbr.rel (0) target = $region73
    $region72: #{tpu_custom_call.1} parent=1 // pred_region
      %685 = dma.done [#allocation4], 32
    $region73: #{tpu_custom_call.1} parent=1 // pred_fallthru
      _
    %686 = vsyncpa [#allocation3], 1
    %687 = vsyncpa [#allocation6], 1
    %688 = vsyncpa [#allocation9], 1
    %689 = vsyncpa [#allocation12], 1
    %690 = vsyncpa [#allocation4], 1

</llo_original>
